<compile_context>
chip_gen: v5e
topology: v5e:2x2
jax: 0.10.0
libtpu: 0.0.40
codegen_flags: <defaults>
</compile_context>

<pallas_src>
import functools

import jax
import jax.numpy as jnp
from jax.experimental import pallas as pl
from jax.experimental.pallas import tpu as pltpu

LANE = 128
MAX_SINGLE_TILE = 2048   # batches up to this run as one grid step (no pad, no
                         # per-step overhead); larger batches split into 1024-row
                         # tiles (~1 MiB/out tile -> fits default scoped VMEM on
                         # v5e/v6e/v7x).  On v7x with batch >= 256 you may pass
                         # tile_b = batch // 2 so the "parallel" grid axis can
                         # shard across its two TensorCores.


def dqn_kernel(x_ref, w1_ref, b1_ref, w2_ref, b2_ref, o_ref):
    x = x_ref[...]                      # (tile_b, in_states) f32, in_states tiny (2)
    w1 = w1_ref[...]                    # (in_states, H_PAD) f32

    # fc1 on the VPU: K == in_states == 2, so an MXU matmul would be ~1%
    # occupied.  Do K broadcast-FMAs instead (static unroll over in_states).
    h = jnp.broadcast_to(b1_ref[...], (x.shape[0], w1.shape[1]))
    for i in range(x.shape[1]):
        h = h + x[:, i:i + 1] * w1[i:i + 1, :]
    h = jnp.maximum(h, 0.0)             # ReLU (padded hidden lanes stay 0)

    # Output layer on the MXU: bf16 inputs, f32 accumulation, lane-dense N.
    y = jnp.dot(h.astype(w2_ref.dtype), w2_ref[...],
                preferred_element_type=jnp.float32)
    o_ref[...] = y + b2_ref[...]


def make_dqn_params(w1, b1, w2, b2, lane=LANE):
    """One-time re-layout from PyTorch (out_features, in_features) convention
    to padded, lane-dense (in, out) tiles.  w2 is stored in bf16 for the MXU.
    Call once at network init / after each weight update, NOT per forward."""
    h1, in_states = w1.shape
    out_actions = w2.shape[0]
    h_pad = max(lane, pl.cdiv(h1, lane) * lane)
    n_pad = max(lane, pl.cdiv(out_actions, lane) * lane)

    w1_p = jnp.zeros((in_states, h_pad), jnp.float32)
    w1_p = w1_p.at[:, :h1].set(jnp.asarray(w1, jnp.float32).T)
    b1_p = jnp.zeros((1, h_pad), jnp.float32)
    b1_p = b1_p.at[:, :h1].set(jnp.asarray(b1, jnp.float32))
    w2_p = jnp.zeros((h_pad, n_pad), jnp.float32)
    w2_p = w2_p.at[:h1, :out_actions].set(jnp.asarray(w2, jnp.float32).T)
    b2_p = jnp.zeros((1, n_pad), jnp.float32)
    b2_p = b2_p.at[:, :out_actions].set(jnp.asarray(b2, jnp.float32))
    return w1_p, b1_p, w2_p.astype(jnp.bfloat16), b2_p


def make_dqn_pair_params(online, target, lane=LANE):
    """Pack the online and target networks into ONE kernel's parameters.
    Hidden dims are stacked along K and outputs along N (block-diagonal w2),
    so a single (B, 2*H_PAD) @ (2*H_PAD, 2*N_PAD) matmul evaluates BOTH nets:
    N = 256 fills the 256-wide v6e/v7x MXU and saves a whole pallas_call.
    online/target: tuples (w1, b1, w2, b2) in PyTorch layout."""
    w1o, b1o, w2o, b2o = online
    w1t, b1t, w2t, b2t = target
    h1, in_states = w1o.shape
    out_actions = w2o.shape[0]
    h_pad = max(lane, pl.cdiv(h1, lane) * lane)
    n_pad = max(lane, pl.cdiv(out_actions, lane) * lane)

    w1_p = jnp.zeros((in_states, 2 * h_pad), jnp.float32)
    w1_p = w1_p.at[:, :h1].set(jnp.asarray(w1o, jnp.float32).T)
    w1_p = w1_p.at[:, h_pad:h_pad + h1].set(jnp.asarray(w1t, jnp.float32).T)
    b1_p = jnp.zeros((1, 2 * h_pad), jnp.float32)
    b1_p = b1_p.at[:, :h1].set(jnp.asarray(b1o, jnp.float32))
    b1_p = b1_p.at[:, h_pad:h_pad + h1].set(jnp.asarray(b1t, jnp.float32))
    w2_p = jnp.zeros((2 * h_pad, 2 * n_pad), jnp.float32)
    w2_p = w2_p.at[:h1, :out_actions].set(jnp.asarray(w2o, jnp.float32).T)
    w2_p = w2_p.at[h_pad:h_pad + h1, n_pad:n_pad + out_actions].set(
        jnp.asarray(w2t, jnp.float32).T)
    b2_p = jnp.zeros((1, 2 * n_pad), jnp.float32)
    b2_p = b2_p.at[:, :out_actions].set(jnp.asarray(b2o, jnp.float32))
    b2_p = b2_p.at[:, n_pad:n_pad + out_actions].set(jnp.asarray(b2t, jnp.float32))
    return w1_p, b1_p, w2_p.astype(jnp.bfloat16), b2_p


@functools.partial(jax.jit,
                   static_argnames=("out_actions", "tile_b", "return_padded"))
def dqn_forward(x, w1_p, b1_p, w2_p, b2_p, *, out_actions=None, tile_b=None,
                return_padded=False):
    """x: (B, in_states) float; params from make_dqn_params / make_dqn_pair_params.
    Returns (B, out_actions), or the padded (B_pad, N_PAD) slab when
    return_padded=True / out_actions=None (skips the trailing slice launch)."""
    x = jnp.asarray(x, jnp.float32)
    B, in_states = x.shape
    h_pad, n_pad = w2_p.shape

    # Tile selection: one grid step (tile_b == B, no alignment constraint, no
    # jnp.pad copy of x) for typical replay/eval batches; split only for very
    # large batches, using big 1024-row tiles to amortize the per-step cost.
    if tile_b is None:
        tile_b = B if B <= MAX_SINGLE_TILE else 1024
    tile_b = min(tile_b, B)
    if B <= tile_b:
        tile_b, b_pad = B, B
    else:
        b_pad = pl.cdiv(B, tile_b) * tile_b
    if b_pad != B:
        # Rare fallback: only when B > tile_b and not tile-aligned.
        x = jnp.pad(x, ((0, b_pad - B), (0, 0)))
    grid = (b_pad // tile_b,)

    out = pl.pallas_call(
        dqn_kernel,
        out_shape=jax.ShapeDtypeStruct((b_pad, n_pad), jnp.float32),
        grid_spec=pltpu.PrefetchScalarGridSpec(
            num_scalar_prefetch=0,
            grid=grid,
            in_specs=[
                pl.BlockSpec((tile_b, in_states), lambda i: (i, 0)),   # x tile
                pl.BlockSpec((in_states, h_pad), lambda i: (0, 0)),    # w1
                pl.BlockSpec((1, h_pad), lambda i: (0, 0)),            # b1
                pl.BlockSpec((h_pad, n_pad), lambda i: (0, 0)),        # w2 (bf16)
                pl.BlockSpec((1, n_pad), lambda i: (0, 0)),            # b2
            ],
            out_specs=pl.BlockSpec((tile_b, n_pad), lambda i: (i, 0)),
        ),
        compiler_params=pltpu.CompilerParams(
            dimension_semantics=("parallel",)),       # megacore-shardable (v7x)
        cost_estimate=pl.CostEstimate(
            flops=2 * b_pad * (in_states * h_pad + h_pad * n_pad),
            transcendentals=0,
            bytes_accessed=(4 * (b_pad * in_states + in_states * h_pad + h_pad
                                 + n_pad + b_pad * n_pad)
                            + 2 * h_pad * n_pad),
        ),
    )(x, w1_p, b1_p, w2_p, b2_p)

    if return_padded or out_actions is None:
        return out
    return out[:B, :out_actions]


def dqn_reference(x, w1, b1, w2, b2):
    h = jnp.maximum(x @ w1.T + b1, 0.0)
    return h @ w2.T + b2


if __name__ == "__main__":
    # MountainCar-v0: observation dim 2, actions 3; small hidden layer.
    in_states, h1_nodes, out_actions = 2, 32, 3
    batch = 128
    n_pad = max(LANE, pl.cdiv(out_actions, LANE) * LANE)

    key = jax.random.PRNGKey(0)
    kx, k1, k2, k3, k4, k5, k6, k7, k8 = jax.random.split(key, 9)

    # Deterministic init mimicking nn.Linear (uniform ±1/sqrt(fan_in)),
    # PyTorch (out_features, in_features) convention.  Two nets: online+target.
    lim1 = 1.0 / jnp.sqrt(jnp.float32(in_states))
    lim2 = 1.0 / jnp.sqrt(jnp.float32(h1_nodes))
    w1 = jax.random.uniform(k1, (h1_nodes, in_states), jnp.float32, -lim1, lim1)
    b1 = jax.random.uniform(k2, (h1_nodes,), jnp.float32, -lim1, lim1)
    w2 = jax.random.uniform(k3, (out_actions, h1_nodes), jnp.float32, -lim2, lim2)
    b2 = jax.random.uniform(k4, (out_actions,), jnp.float32, -lim2, lim2)
    tw1 = jax.random.uniform(k5, (h1_nodes, in_states), jnp.float32, -lim1, lim1)
    tb1 = jax.random.uniform(k6, (h1_nodes,), jnp.float32, -lim1, lim1)
    tw2 = jax.random.uniform(k7, (out_actions, h1_nodes), jnp.float32, -lim2, lim2)
    tb2 = jax.random.uniform(k8, (out_actions,), jnp.float32, -lim2, lim2)

    x = jax.random.normal(kx, (batch, in_states), jnp.float32)

    # ---- single-net forward (the module's exact semantics) -----------------
    params = make_dqn_params(w1, b1, w2, b2)          # one-time re-layout
    out = dqn_forward(x, *params, out_actions=out_actions)
    out = jax.block_until_ready(out)
    ref = dqn_reference(x, w1, b1, w2, b2)
    assert out.shape == (batch, out_actions)
    # bf16 MXU inputs with f32 accumulation -> loosened tolerance.
    assert jnp.allclose(out, ref, atol=2e-2, rtol=2e-2)

    # ---- fused online+target forward: ONE pallas_call, N = 256 matmul ------
    pair = make_dqn_pair_params((w1, b1, w2, b2), (tw1, tb1, tw2, tb2))
    both = dqn_forward(x, *pair, return_padded=True)  # (batch, 2*n_pad) slab
    both = jax.block_until_ready(both)
    q_online = both[:, :out_actions]
    q_target = both[:, n_pad:n_pad + out_actions]
    ref_t = dqn_reference(x, tw1, tb1, tw2, tb2)
    assert jnp.allclose(q_online, ref, atol=2e-2, rtol=2e-2)
    assert jnp.allclose(q_target, ref_t, atol=2e-2, rtol=2e-2)

    print("KERNEL_OK")
</pallas_src>

<mosaic_0001>
module attributes {stable_mosaic.version = 11 : i64} {
  func.func @dqn_kernel(%arg0: i32, %arg1: memref<128x2xf32, #tpu.memory_space<vmem>>, %arg2: memref<2x128xf32, #tpu.memory_space<vmem>>, %arg3: memref<1x128xf32, #tpu.memory_space<vmem>>, %arg4: memref<128x128xbf16, #tpu.memory_space<vmem>>, %arg5: memref<1x128xf32, #tpu.memory_space<vmem>>, %arg6: memref<128x128xf32, #tpu.memory_space<vmem>>) attributes {dimension_semantics = [#tpu.dimension_semantics<parallel>], iteration_bounds = array<i64: 1>, scalar_prefetch = 0 : i64, scratch_operands = 0 : i64, tpu.core_type = #tpu.core_type<tc>, window_params = [{transform_indices = @transform_0, window_bounds = array<i64: 128, 2>}, {pipeline_mode = #tpu.pipeline_mode<synchronous>, transform_indices = @transform_1, window_bounds = array<i64: 2, 128>}, {pipeline_mode = #tpu.pipeline_mode<synchronous>, transform_indices = @transform_2, window_bounds = array<i64: 1, 128>}, {pipeline_mode = #tpu.pipeline_mode<synchronous>, transform_indices = @transform_3, window_bounds = array<i64: 128, 128>}, {pipeline_mode = #tpu.pipeline_mode<synchronous>, transform_indices = @transform_4, window_bounds = array<i64: 1, 128>}, {transform_indices = @transform_5, window_bounds = array<i64: 128, 128>}]} {
    %c0 = arith.constant 0 : index
    %c0_0 = arith.constant 0 : index
    %0 = vector.load %arg1[%c0, %c0_0] : memref<128x2xf32, #tpu.memory_space<vmem>>, vector<128x2xf32>
    %c0_1 = arith.constant 0 : index
    %c0_2 = arith.constant 0 : index
    %1 = vector.load %arg2[%c0_1, %c0_2] : memref<2x128xf32, #tpu.memory_space<vmem>>, vector<2x128xf32>
    %c0_3 = arith.constant 0 : index
    %c0_4 = arith.constant 0 : index
    %2 = vector.load %arg3[%c0_3, %c0_4] : memref<1x128xf32, #tpu.memory_space<vmem>>, vector<1x128xf32>
    %3 = vector.shape_cast %2 : vector<1x128xf32> to vector<1x128xf32>
    %4 = vector.broadcast %3 : vector<1x128xf32> to vector<128x128xf32>
    %5 = vector.extract_strided_slice %0 {offsets = [0, 0], sizes = [128, 1], strides = [1, 1]} : vector<128x2xf32> to vector<128x1xf32>
    %6 = vector.extract_strided_slice %1 {offsets = [0, 0], sizes = [1, 128], strides = [1, 1]} : vector<2x128xf32> to vector<1x128xf32>
    %7 = vector.broadcast %5 : vector<128x1xf32> to vector<128x128xf32>
    %8 = vector.broadcast %6 : vector<1x128xf32> to vector<128x128xf32>
    %9 = arith.mulf %7, %8 : vector<128x128xf32>
    %10 = arith.addf %4, %9 : vector<128x128xf32>
    %11 = vector.extract_strided_slice %0 {offsets = [0, 1], sizes = [128, 1], strides = [1, 1]} : vector<128x2xf32> to vector<128x1xf32>
    %12 = vector.extract_strided_slice %1 {offsets = [1, 0], sizes = [1, 128], strides = [1, 1]} : vector<2x128xf32> to vector<1x128xf32>
    %13 = vector.broadcast %11 : vector<128x1xf32> to vector<128x128xf32>
    %14 = vector.broadcast %12 : vector<1x128xf32> to vector<128x128xf32>
    %15 = arith.mulf %13, %14 : vector<128x128xf32>
    %16 = arith.addf %10, %15 : vector<128x128xf32>
    %cst = arith.constant 0.000000e+00 : f32
    %17 = vector.broadcast %cst : f32 to vector<128x128xf32>
    %18 = arith.maximumf %16, %17 : vector<128x128xf32>
    %19 = arith.truncf %18 : vector<128x128xf32> to vector<128x128xbf16>
    %c0_5 = arith.constant 0 : index
    %c0_6 = arith.constant 0 : index
    %20 = vector.load %arg4[%c0_5, %c0_6] : memref<128x128xbf16, #tpu.memory_space<vmem>>, vector<128x128xbf16>
    %cst_7 = arith.constant dense<0.000000e+00> : vector<128x128xf32>
    %21 = tpu.matmul %19, %20, %cst_7 {dimension_numbers = #tpu.dot_dimension_numbers<[1], [0], [0], [1], [0, 0, 1, 1], [], []>} : vector<128x128xbf16>, vector<128x128xbf16>, vector<128x128xf32> -> vector<128x128xf32>
    %c0_8 = arith.constant 0 : index
    %c0_9 = arith.constant 0 : index
    %22 = vector.load %arg5[%c0_8, %c0_9] : memref<1x128xf32, #tpu.memory_space<vmem>>, vector<1x128xf32>
    %23 = vector.broadcast %22 : vector<1x128xf32> to vector<128x128xf32>
    %24 = arith.addf %21, %23 : vector<128x128xf32>
    %c0_10 = arith.constant 0 : index
    %c0_11 = arith.constant 0 : index
    %25 = vector.load %arg6[%c0_10, %c0_11] : memref<128x128xf32, #tpu.memory_space<vmem>>, vector<128x128xf32>
    tpu.vector_store %arg6[%c0_10, %c0_11], %24 {strides = array<i32>} : memref<128x128xf32, #tpu.memory_space<vmem>>, vector<128x128xf32>,
    return
  }
  func.func @transform_0(%arg0: i32) -> (i32, i32) {
    %c0_i32 = arith.constant 0 : i32
    %c0_i32_0 = arith.constant 0 : i32
    return %arg0, %c0_i32 : i32, i32
  }
  func.func @transform_1(%arg0: i32) -> (i32, i32) {
    %c0_i32 = arith.constant 0 : i32
    %c0_i32_0 = arith.constant 0 : i32
    %c0_i32_1 = arith.constant 0 : i32
    return %c0_i32, %c0_i32_0 : i32, i32
  }
  func.func @transform_2(%arg0: i32) -> (i32, i32) {
    %c0_i32 = arith.constant 0 : i32
    %c0_i32_0 = arith.constant 0 : i32
    %c0_i32_1 = arith.constant 0 : i32
    return %c0_i32, %c0_i32_0 : i32, i32
  }
  func.func @transform_3(%arg0: i32) -> (i32, i32) {
    %c0_i32 = arith.constant 0 : i32
    %c0_i32_0 = arith.constant 0 : i32
    %c0_i32_1 = arith.constant 0 : i32
    return %c0_i32, %c0_i32_0 : i32, i32
  }
  func.func @transform_4(%arg0: i32) -> (i32, i32) {
    %c0_i32 = arith.constant 0 : i32
    %c0_i32_0 = arith.constant 0 : i32
    %c0_i32_1 = arith.constant 0 : i32
    return %c0_i32, %c0_i32_0 : i32, i32
  }
  func.func @transform_5(%arg0: i32) -> (i32, i32) {
    %c0_i32 = arith.constant 0 : i32
    %c0_i32_0 = arith.constant 0 : i32
    return %arg0, %c0_i32 : i32, i32
  }
}

</mosaic_0001>

<llo_original>
// kernel: dqn_forward.1
$region0: #{dqn_forward.1}
  #allocation0 [shape = 'u32[]', space=smem, size = 0x4, offset = 0x4, fixed_abs, tag = 'smem constant byte address 0x4 - core index']
  #allocation1 [shape = 'u32[72,128]{1,0:T(1,128)}', space=vmem, size = 0x9000, scoped, tag = 'internal scratch']
  %s0 = inlined_call_operand.vmem [shape: f32[128,2], index: 0, kind: input, shape index: {}]
  %s1 = inlined_call_operand.vmem [shape: f32[2,128], index: 1, kind: input, shape index: {}]
  %s2 = inlined_call_operand.vmem [shape: f32[1,128], index: 2, kind: input, shape index: {}]
  %s3 = inlined_call_operand.vmem [shape: bf16[128,128], index: 3, kind: input, shape index: {}]
  %s4 = inlined_call_operand.vmem [shape: f32[1,128], index: 4, kind: input, shape index: {}]
  %s5 = inlined_call_operand.vmem [shape: f32[128,128], index: 5, kind: output, shape index: {}]
  %s6 = sld [smem:[#allocation0]]
  $region30: #{dqn_forward.1} parent=0
    _
  %s8 = ssub.s32 1, %s6
  %s9 = scalar_select 0, %s8, %s6
  // Predicated region
  $region2: #{dqn_forward.1} parent=0 // pred_check
    _
  $region3: #{dqn_forward.1} parent=0 // pred_check_branch
    %11 = sbr.rel (0) target = $region5
  $region4: #{dqn_forward.1} parent=0 // pred_region
    _
  $region5: #{dqn_forward.1} parent=0 // pred_fallthru
    _
  // Predicated region
  $region6: #{dqn_forward.1} parent=0 // pred_check
    _
  $region7: #{dqn_forward.1} parent=0 // pred_check_branch
    %13 = sbr.rel (0) target = $region9
  $region8: #{dqn_forward.1} parent=0 // pred_region
    _
  $region9: #{dqn_forward.1} parent=0 // pred_fallthru
    _
  // Predicated region
  $region10: #{dqn_forward.1} parent=0 // pred_check
    _
  $region11: #{dqn_forward.1} parent=0 // pred_check_branch
    %15 = sbr.rel (0) target = $region13
  $region12: #{dqn_forward.1} parent=0 // pred_region
    _
  $region13: #{dqn_forward.1} parent=0 // pred_fallthru
    _
  // Predicated region
  $region14: #{dqn_forward.1} parent=0 // pred_check
    _
  $region15: #{dqn_forward.1} parent=0 // pred_check_branch
    %17 = sbr.rel (0) target = $region17
  $region16: #{dqn_forward.1} parent=0 // pred_region
    _
  $region17: #{dqn_forward.1} parent=0 // pred_fallthru
    _
  // Predicated region
  $region18: #{dqn_forward.1} parent=0 // pred_check
    _
  $region19: #{dqn_forward.1} parent=0 // pred_check_branch
    %19 = sbr.rel (0) target = $region21
  $region20: #{dqn_forward.1} parent=0 // pred_region
    _
  $region21: #{dqn_forward.1} parent=0 // pred_fallthru
    _
  %v20 = vld [vmem:[%s0] sm:$0xff]
  %v21 = vld [vmem:[%s0 + $0x8] sm:$0xff]
  %v22 = vld [vmem:[%s0 + $0x10] sm:$0xff]
  %v23 = vld [vmem:[%s0 + $0x18] sm:$0xff]
  %v24 = vld [vmem:[%s0 + $0x20] sm:$0xff]
  %v25 = vld [vmem:[%s0 + $0x28] sm:$0xff]
  %v26 = vld [vmem:[%s0 + $0x30] sm:$0xff]
  %v27 = vld [vmem:[%s0 + $0x38] sm:$0xff]
  %v28 = vld [vmem:[%s0 + $0x40] sm:$0xff]
  %v29 = vld [vmem:[%s0 + $0x48] sm:$0xff]
  %v30 = vld [vmem:[%s0 + $0x50] sm:$0xff]
  %v31 = vld [vmem:[%s0 + $0x58] sm:$0xff]
  %v32 = vld [vmem:[%s0 + $0x60] sm:$0xff]
  %v33 = vld [vmem:[%s0 + $0x68] sm:$0xff]
  %v34 = vld [vmem:[%s0 + $0x70] sm:$0xff]
  %v35 = vld [vmem:[%s0 + $0x78] sm:$0xff]
  %v36 = vld [vmem:[%s1] sm:$0x3]
  %v37 = vld [vmem:[%s2] sm:$0x1]
  %v39 = vperm.slane %v37, 0
  %42 = vset.pattern.permute.xlu0 0
  %43 = vperm.xlu0 %42, %v20
  %v44 = vpop.permute.xlu0 %43
  %47 = vset.pattern.permute.xlu0 0
  %48 = vperm.xlu0 %47, %v21
  %v49 = vpop.permute.xlu0 %48
  %52 = vset.pattern.permute.xlu0 0
  %53 = vperm.xlu0 %52, %v22
  %v54 = vpop.permute.xlu0 %53
  %57 = vset.pattern.permute.xlu0 0
  %58 = vperm.xlu0 %57, %v23
  %v59 = vpop.permute.xlu0 %58
  %62 = vset.pattern.permute.xlu0 0
  %63 = vperm.xlu0 %62, %v24
  %v64 = vpop.permute.xlu0 %63
  %67 = vset.pattern.permute.xlu0 0
  %68 = vperm.xlu0 %67, %v25
  %v69 = vpop.permute.xlu0 %68
  %72 = vset.pattern.permute.xlu0 0
  %73 = vperm.xlu0 %72, %v26
  %v74 = vpop.permute.xlu0 %73
  %77 = vset.pattern.permute.xlu0 0
  %78 = vperm.xlu0 %77, %v27
  %v79 = vpop.permute.xlu0 %78
  %82 = vset.pattern.permute.xlu0 0
  %83 = vperm.xlu0 %82, %v28
  %v84 = vpop.permute.xlu0 %83
  %87 = vset.pattern.permute.xlu0 0
  %88 = vperm.xlu0 %87, %v29
  %v89 = vpop.permute.xlu0 %88
  %92 = vset.pattern.permute.xlu0 0
  %93 = vperm.xlu0 %92, %v30
  %v94 = vpop.permute.xlu0 %93
  %97 = vset.pattern.permute.xlu0 0
  %98 = vperm.xlu0 %97, %v31
  %v99 = vpop.permute.xlu0 %98
  %102 = vset.pattern.permute.xlu0 0
  %103 = vperm.xlu0 %102, %v32
  %v104 = vpop.permute.xlu0 %103
  %107 = vset.pattern.permute.xlu0 0
  %108 = vperm.xlu0 %107, %v33
  %v109 = vpop.permute.xlu0 %108
  %112 = vset.pattern.permute.xlu0 0
  %113 = vperm.xlu0 %112, %v34
  %v114 = vpop.permute.xlu0 %113
  %117 = vset.pattern.permute.xlu0 0
  %118 = vperm.xlu0 %117, %v35
  %v119 = vpop.permute.xlu0 %118
  %v121 = vperm.slane %v36, 0
  %v122 = vmul.f32 %v44, %v121
  %v123 = vmul.f32 %v49, %v121
  %v124 = vmul.f32 %v54, %v121
  %v125 = vmul.f32 %v59, %v121
  %v126 = vmul.f32 %v64, %v121
  %v127 = vmul.f32 %v69, %v121
  %v128 = vmul.f32 %v74, %v121
  %v129 = vmul.f32 %v79, %v121
  %v130 = vmul.f32 %v84, %v121
  %v131 = vmul.f32 %v89, %v121
  %v132 = vmul.f32 %v94, %v121
  %v133 = vmul.f32 %v99, %v121
  %v134 = vmul.f32 %v104, %v121
  %v135 = vmul.f32 %v109, %v121
  %v136 = vmul.f32 %v114, %v121
  %v137 = vmul.f32 %v119, %v121
  %v138 = vadd.f32 %v39, %v122
  %v139 = vadd.f32 %v39, %v123
  %v140 = vadd.f32 %v39, %v124
  %v141 = vadd.f32 %v39, %v125
  %v142 = vadd.f32 %v39, %v126
  %v143 = vadd.f32 %v39, %v127
  %v144 = vadd.f32 %v39, %v128
  %v145 = vadd.f32 %v39, %v129
  %v146 = vadd.f32 %v39, %v130
  %v147 = vadd.f32 %v39, %v131
  %v148 = vadd.f32 %v39, %v132
  %v149 = vadd.f32 %v39, %v133
  %v150 = vadd.f32 %v39, %v134
  %v151 = vadd.f32 %v39, %v135
  %v152 = vadd.f32 %v39, %v136
  %v153 = vadd.f32 %v39, %v137
  %154 = vset.pattern.permute.xlu0 1
  %155 = vperm.xlu0 %154, %v20
  %v156 = vpop.permute.xlu0 %155
  %158 = vset.pattern.permute.xlu0 1
  %159 = vperm.xlu0 %158, %v21
  %v160 = vpop.permute.xlu0 %159
  %162 = vset.pattern.permute.xlu0 1
  %163 = vperm.xlu0 %162, %v22
  %v164 = vpop.permute.xlu0 %163
  %166 = vset.pattern.permute.xlu0 1
  %167 = vperm.xlu0 %166, %v23
  %v168 = vpop.permute.xlu0 %167
  %170 = vset.pattern.permute.xlu0 1
  %171 = vperm.xlu0 %170, %v24
  %v172 = vpop.permute.xlu0 %171
  %174 = vset.pattern.permute.xlu0 1
  %175 = vperm.xlu0 %174, %v25
  %v176 = vpop.permute.xlu0 %175
  %178 = vset.pattern.permute.xlu0 1
  %179 = vperm.xlu0 %178, %v26
  %v180 = vpop.permute.xlu0 %179
  %182 = vset.pattern.permute.xlu0 1
  %183 = vperm.xlu0 %182, %v27
  %v184 = vpop.permute.xlu0 %183
  %186 = vset.pattern.permute.xlu0 1
  %187 = vperm.xlu0 %186, %v28
  %v188 = vpop.permute.xlu0 %187
  %190 = vset.pattern.permute.xlu0 1
  %191 = vperm.xlu0 %190, %v29
  %v192 = vpop.permute.xlu0 %191
  %194 = vset.pattern.permute.xlu0 1
  %195 = vperm.xlu0 %194, %v30
  %v196 = vpop.permute.xlu0 %195
  %198 = vset.pattern.permute.xlu0 1
  %199 = vperm.xlu0 %198, %v31
  %v200 = vpop.permute.xlu0 %199
  %202 = vset.pattern.permute.xlu0 1
  %203 = vperm.xlu0 %202, %v32
  %v204 = vpop.permute.xlu0 %203
  %206 = vset.pattern.permute.xlu0 1
  %207 = vperm.xlu0 %206, %v33
  %v208 = vpop.permute.xlu0 %207
  %210 = vset.pattern.permute.xlu0 1
  %211 = vperm.xlu0 %210, %v34
  %v212 = vpop.permute.xlu0 %211
  %214 = vset.pattern.permute.xlu0 1
  %215 = vperm.xlu0 %214, %v35
  %v216 = vpop.permute.xlu0 %215
  %v218 = vperm.slane %v36, 1
  %v219 = vmul.f32 %v156, %v218
  %v220 = vmul.f32 %v160, %v218
  %v221 = vmul.f32 %v164, %v218
  %v222 = vmul.f32 %v168, %v218
  %v223 = vmul.f32 %v172, %v218
  %v224 = vmul.f32 %v176, %v218
  %v225 = vmul.f32 %v180, %v218
  %v226 = vmul.f32 %v184, %v218
  %v227 = vmul.f32 %v188, %v218
  %v228 = vmul.f32 %v192, %v218
  %v229 = vmul.f32 %v196, %v218
  %v230 = vmul.f32 %v200, %v218
  %v231 = vmul.f32 %v204, %v218
  %v232 = vmul.f32 %v208, %v218
  %v233 = vmul.f32 %v212, %v218
  %v234 = vmul.f32 %v216, %v218
  %v235 = vadd.f32 %v138, %v219
  %v236 = vadd.f32 %v139, %v220
  %v237 = vadd.f32 %v140, %v221
  %v238 = vadd.f32 %v141, %v222
  %v239 = vadd.f32 %v142, %v223
  %v240 = vadd.f32 %v143, %v224
  %v241 = vadd.f32 %v144, %v225
  %v242 = vadd.f32 %v145, %v226
  %v243 = vadd.f32 %v146, %v227
  %v244 = vadd.f32 %v147, %v228
  %v245 = vadd.f32 %v148, %v229
  %v246 = vadd.f32 %v149, %v230
  %v247 = vadd.f32 %v150, %v231
  %v248 = vadd.f32 %v151, %v232
  %v249 = vadd.f32 %v152, %v233
  %v250 = vadd.f32 %v153, %v234
  %v251 = vmax.f32 %v235, 0.0
  %v252 = vmax.f32 %v236, 0.0
  %v253 = vmax.f32 %v237, 0.0
  %v254 = vmax.f32 %v238, 0.0
  %v255 = vmax.f32 %v239, 0.0
  %v256 = vmax.f32 %v240, 0.0
  %v257 = vmax.f32 %v241, 0.0
  %v258 = vmax.f32 %v242, 0.0
  %v259 = vmax.f32 %v243, 0.0
  %v260 = vmax.f32 %v244, 0.0
  %v261 = vmax.f32 %v245, 0.0
  %v262 = vmax.f32 %v246, 0.0
  %v263 = vmax.f32 %v247, 0.0
  %v264 = vmax.f32 %v248, 0.0
  %v265 = vmax.f32 %v249, 0.0
  %v266 = vmax.f32 %v250, 0.0
  %v267 = vpack.c.bf16 %v252, %v251
  %v268 = vpack.c.bf16 %v254, %v253
  %v269 = vpack.c.bf16 %v256, %v255
  %v270 = vpack.c.bf16 %v258, %v257
  %v271 = vpack.c.bf16 %v260, %v259
  %v272 = vpack.c.bf16 %v262, %v261
  %v273 = vpack.c.bf16 %v264, %v263
  %v274 = vpack.c.bf16 %v266, %v265
  %v275 = vld [vmem:[%s3] sm:$0xf]
  %v276 = vld [vmem:[%s3 + $0x4] sm:$0xf]
  %v277 = vld [vmem:[%s3 + $0x8] sm:$0xf]
  %v278 = vld [vmem:[%s3 + $0xc] sm:$0xf]
  %v279 = vld [vmem:[%s3 + $0x10] sm:$0xf]
  %v280 = vld [vmem:[%s3 + $0x14] sm:$0xf]
  %v281 = vld [vmem:[%s3 + $0x18] sm:$0xf]
  %v282 = vld [vmem:[%s3 + $0x1c] sm:$0xf]
  %v283 = vld [vmem:[%s3 + $0x20] sm:$0xf]
  %v284 = vld [vmem:[%s3 + $0x24] sm:$0xf]
  %v285 = vld [vmem:[%s3 + $0x28] sm:$0xf]
  %v286 = vld [vmem:[%s3 + $0x2c] sm:$0xf]
  %v287 = vld [vmem:[%s3 + $0x30] sm:$0xf]
  %v288 = vld [vmem:[%s3 + $0x34] sm:$0xf]
  %v289 = vld [vmem:[%s3 + $0x38] sm:$0xf]
  %v290 = vld [vmem:[%s3 + $0x3c] sm:$0xf]
  %v291 = vld [vmem:[%s4] sm:$0x1]
  %v293 = vperm.slane %v291, 0
  %v311 = vunpack.c.l.b16 %v275
  %v312 = vunpack.c.l.b16 %v276
  %v313 = vunpack.c.l.b16 %v277
  %v314 = vunpack.c.l.b16 %v278
  %v315 = vunpack.c.l.b16 %v279
  %v316 = vunpack.c.l.b16 %v280
  %v317 = vunpack.c.l.b16 %v281
  %v318 = vunpack.c.l.b16 %v282
  %v319 = vunpack.c.l.b16 %v283
  %v320 = vunpack.c.l.b16 %v284
  %v321 = vunpack.c.l.b16 %v285
  %v322 = vunpack.c.l.b16 %v286
  %v323 = vunpack.c.l.b16 %v287
  %v324 = vunpack.c.l.b16 %v288
  %v325 = vunpack.c.l.b16 %v289
  %v326 = vunpack.c.l.b16 %v290
  %v327 = vpack.c.b16 %v312, %v311
  %v328 = vpack.c.b16 %v314, %v313
  %v329 = vpack.c.b16 %v316, %v315
  %v330 = vpack.c.b16 %v318, %v317
  %v331 = vpack.c.b16 %v320, %v319
  %v332 = vpack.c.b16 %v322, %v321
  %v333 = vpack.c.b16 %v324, %v323
  %v334 = vpack.c.b16 %v326, %v325
  %343 = vmatpush.bf16.msra.mxu0 %v334
  %344 = vmatpush.bf16.msra.mxu0 %v333
  %345 = vmatpush.bf16.msra.mxu0 %v332
  %346 = vmatpush.bf16.msra.mxu0 %v331
  %347 = vmatpush.bf16.msra.mxu0 %v330
  %348 = vmatpush.bf16.msra.mxu0 %v329
  %349 = vmatpush.bf16.msra.mxu0 %v328
  %350 = vmatpush.bf16.msra.mxu0 %v327
  %351 = vmatmul.bf16.gmra.mxu0 %v267
  %v352 = vpop.f32.mrf.mxu0
  %v353 = vadd.f32 %v293, %v352
  %v354 = vpop.f32.mrf.mxu0
  %v355 = vadd.f32 %v293, %v354
  %356 = vmatmul.bf16.gmra.mxu0 %v268
  %v357 = vpop.f32.mrf.mxu0
  %v358 = vadd.f32 %v293, %v357
  %v359 = vpop.f32.mrf.mxu0
  %v360 = vadd.f32 %v293, %v359
  %361 = vmatmul.bf16.gmra.mxu0 %v269
  %v362 = vpop.f32.mrf.mxu0
  %v363 = vadd.f32 %v293, %v362
  %v364 = vpop.f32.mrf.mxu0
  %v365 = vadd.f32 %v293, %v364
  %366 = vmatmul.bf16.gmra.mxu0 %v270
  %v367 = vpop.f32.mrf.mxu0
  %v368 = vadd.f32 %v293, %v367
  %v369 = vpop.f32.mrf.mxu0
  %v370 = vadd.f32 %v293, %v369
  %371 = vmatmul.bf16.gmra.mxu0 %v271
  %v372 = vpop.f32.mrf.mxu0
  %v373 = vadd.f32 %v293, %v372
  %v374 = vpop.f32.mrf.mxu0
  %v375 = vadd.f32 %v293, %v374
  %376 = vmatmul.bf16.gmra.mxu0 %v272
  %v377 = vpop.f32.mrf.mxu0
  %v378 = vadd.f32 %v293, %v377
  %v379 = vpop.f32.mrf.mxu0
  %v380 = vadd.f32 %v293, %v379
  %381 = vmatmul.bf16.gmra.mxu0 %v273
  %v382 = vpop.f32.mrf.mxu0
  %v383 = vadd.f32 %v293, %v382
  %v384 = vpop.f32.mrf.mxu0
  %v385 = vadd.f32 %v293, %v384
  %386 = vmatmul.bf16.gmra.mxu0 %v274
  %v387 = vpop.f32.mrf.mxu0
  %v388 = vadd.f32 %v293, %v387
  %v389 = vpop.f32.mrf.mxu0
  %v390 = vadd.f32 %v293, %v389
  %391 = vdwg.mxu0
  %392 = vst [vmem:[%s5] sm:$0xff] %v353
  %393 = vst [vmem:[%s5 + $0x8] sm:$0xff] %v355
  %394 = vst [vmem:[%s5 + $0x10] sm:$0xff] %v358
  %395 = vst [vmem:[%s5 + $0x18] sm:$0xff] %v360
  %396 = vst [vmem:[%s5 + $0x20] sm:$0xff] %v363
  %397 = vst [vmem:[%s5 + $0x28] sm:$0xff] %v365
  %398 = vst [vmem:[%s5 + $0x30] sm:$0xff] %v368
  %399 = vst [vmem:[%s5 + $0x38] sm:$0xff] %v370
  %400 = vst [vmem:[%s5 + $0x40] sm:$0xff] %v373
  %401 = vst [vmem:[%s5 + $0x48] sm:$0xff] %v375
  %402 = vst [vmem:[%s5 + $0x50] sm:$0xff] %v378
  %403 = vst [vmem:[%s5 + $0x58] sm:$0xff] %v380
  %404 = vst [vmem:[%s5 + $0x60] sm:$0xff] %v383
  %405 = vst [vmem:[%s5 + $0x68] sm:$0xff] %v385
  %406 = vst [vmem:[%s5 + $0x70] sm:$0xff] %v388
  %407 = vst [vmem:[%s5 + $0x78] sm:$0xff] %v390
  // Predicated region
  $region22: #{dqn_forward.1} parent=0 // pred_check
    _
  $region23: #{dqn_forward.1} parent=0 // pred_check_branch
    %409 = sbr.rel (0) target = $region25
  $region24: #{dqn_forward.1} parent=0 // pred_region
    _
  $region25: #{dqn_forward.1} parent=0 // pred_fallthru
    _
  // Predicated region
  $region26: #{dqn_forward.1} parent=0 // pred_check
    _
  $region27: #{dqn_forward.1} parent=0 // pred_check_branch
    %411 = sbr.rel (0) target = $region29
  $region28: #{dqn_forward.1} parent=0 // pred_region
    _
  $region29: #{dqn_forward.1} parent=0 // pred_fallthru
    _

</llo_original>
